<compile_context>
chip_gen: v5e
topology: v5e:2x2
jax: 0.10.0
libtpu: 0.0.40
codegen_flags: <defaults>
</compile_context>

<pallas_src>
import jax
import jax.numpy as jnp
from jax.experimental import pallas as pl
from jax.experimental.pallas import tpu as pltpu


def _patch_embed_kernel(x_ref, w_ref, b_ref, o_ref):
    # x_ref: (1, TP, K)  compute-dtype patch tile (streamed over the grid)
    # w_ref: (K, E)      compute-dtype projection weight (VMEM-resident)
    # b_ref: (1, E)      f32 bias (VMEM-resident)
    # o_ref: (1, TP, E)  out-dtype embedded patches
    acc = jnp.dot(x_ref[0], w_ref[...], preferred_element_type=jnp.float32)
    o_ref[0] = (acc + b_ref[...]).astype(o_ref.dtype)


def prepare_patch_embed_params(weight, bias, *, compute_dtype=jnp.bfloat16):
    """Hoistable parameter prep: Conv2d (E, C, p, p) weight -> (K, E) matrix
    with K ordered (c, kh, kw); bias -> (1, E) f32 row.  Do this once at
    parameter-prep time, not per forward call."""
    E, C, ph, pw = weight.shape
    K = C * ph * pw
    w_mat = jnp.transpose(weight.reshape(E, K)).astype(compute_dtype)
    b_row = bias.astype(jnp.float32).reshape(1, E)
    return w_mat, b_row


def _pick_patch_tile(num_patches, target, sublane):
    """Largest divisor of num_patches that is <= target and a multiple of
    `sublane` (16 for bf16 packing, 8 for f32); falls back to multiples of 8,
    then to the full extent (a full-dim block is always BlockSpec-legal)."""
    mults = (sublane,) if sublane == 8 else (sublane, 8)
    limit = min(target, num_patches)
    for mult in mults:
        best = 0
        d = mult
        while d <= limit:
            if num_patches % d == 0:
                best = d
            d += mult
        if best:
            return best
    return num_patches


def patch_embed_prepared(x_nchw, w_mat, b_row, patch_size, *,
                         out_dtype=jnp.float32, tp_target=4096):
    """PatchEmbed.forward (norm_layer=None) given pre-prepared parameters.

    Args:
      x_nchw : (B, C, H, W) image batch (PyTorch NCHW convention).
      w_mat  : (C*p*p, E) projection matrix from prepare_patch_embed_params.
      b_row  : (1, E) f32 bias row.
      patch_size : patch token size (Conv2d kernel == stride).
      out_dtype : output dtype. f32 matches the PyTorch module; bf16 halves the
                  dominant output HBM stream for bf16 downstream blocks.
      tp_target : target patch rows per grid step (tiles are only a few MiB at
                  4096, well under VMEM on all generations).

    Returns:
      (B, num_patches, E) array of dtype out_dtype.
    """
    B, C, H, W = x_nchw.shape
    p = patch_size
    K, E = w_mat.shape
    assert K == C * p * p, (K, C, p)
    nh, nw = H // p, W // p
    num_patches = nh * nw
    compute_dtype = w_mat.dtype

    # --- XLA glue: NCHW -> (B, num_patches, K) patch matrix, (c, kh, kw) order.
    # Cast BEFORE the patchify so the fused transpose+convert pass writes bf16.
    # TODO(synk): fuse this patch extraction into the kernel (see header note).
    xc = x_nchw.astype(compute_dtype)
    patches = xc.reshape(B, C, nh, p, nw, p)
    patches = jnp.transpose(patches, (0, 2, 4, 1, 3, 5)).reshape(B, num_patches, K)

    # Tile the patch axis with a divisor of num_patches (no padding, no slice).
    sublane = 16 if jnp.dtype(compute_dtype).itemsize == 2 else 8
    tp = _pick_patch_tile(num_patches, tp_target, sublane)
    if B * (num_patches // tp) < 2:
        # v7x megacore balance: prefer >= 2 independent grid steps.
        tp_half = _pick_patch_tile(num_patches, max(sublane, num_patches // 2),
                                   sublane)
        if num_patches % tp_half == 0 and num_patches // tp_half >= 2:
            tp = tp_half

    M = B * num_patches
    itemsize = jnp.dtype(compute_dtype).itemsize
    cost = pl.CostEstimate(
        flops=2 * M * K * E,
        transcendentals=0,
        bytes_accessed=(M * K * itemsize            # patch read
                        + K * E * itemsize          # weight read
                        + E * 4                     # bias read
                        + M * E * jnp.dtype(out_dtype).itemsize),  # output write
    )

    return pl.pallas_call(
        _patch_embed_kernel,
        out_shape=jax.ShapeDtypeStruct((B, num_patches, E), out_dtype),
        grid=(B, num_patches // tp),
        in_specs=[
            pl.BlockSpec((1, tp, K), lambda b, i: (b, i, 0)),  # patches, streamed
            pl.BlockSpec((K, E), lambda b, i: (0, 0)),         # weight, VMEM-resident
            pl.BlockSpec((1, E), lambda b, i: (0, 0)),         # bias, VMEM-resident
        ],
        out_specs=pl.BlockSpec((1, tp, E), lambda b, i: (b, i, 0)),
        compiler_params=pltpu.CompilerParams(
            # Both axes independent -> megacore-shard across TCs on v7x.
            dimension_semantics=("parallel", "parallel"),
        ),
        cost_estimate=cost,
    )(patches, w_mat, b_row)


def patch_embed(x_nchw, weight, bias, patch_size, *,
                compute_dtype=jnp.bfloat16, out_dtype=jnp.float32,
                tp_target=4096):
    """Convenience wrapper taking raw Conv2d parameters.  Set
    compute_dtype=jnp.float32 to opt out of the bf16 input/weight cast."""
    w_mat, b_row = prepare_patch_embed_params(weight, bias,
                                              compute_dtype=compute_dtype)
    return patch_embed_prepared(x_nchw, w_mat, b_row, patch_size,
                                out_dtype=out_dtype, tp_target=tp_target)


if __name__ == "__main__":
    # Small, module-consistent shapes:
    # img_size=16, patch_size=4, in_ch=4, embed_dim=32, batch=2
    B, C, H, W = 2, 4, 16, 16
    patch_size = 4
    embed_dim = 32

    key = jax.random.PRNGKey(0)
    kx, kw, kb = jax.random.split(key, 3)

    x = jax.random.normal(kx, (B, C, H, W), dtype=jnp.float32)
    # Conv2d parameters: weight (E, C, p, p), bias (E,)
    weight = jax.random.normal(kw, (embed_dim, C, patch_size, patch_size),
                               dtype=jnp.float32) * 0.02
    bias = jax.random.normal(kb, (embed_dim,), dtype=jnp.float32) * 0.02

    # Parameter prep hoisted out of the per-call path (done once here).
    w_mat, b_row = prepare_patch_embed_params(weight, bias,
                                              compute_dtype=jnp.bfloat16)
    y = patch_embed_prepared(x, w_mat, b_row, patch_size)
    jax.block_until_ready(y)

    # --- references ---
    nh, nw = H // patch_size, W // patch_size
    ref_p = x.reshape(B, C, nh, patch_size, nw, patch_size)
    ref_p = jnp.transpose(ref_p, (0, 2, 4, 1, 3, 5)).reshape(B * nh * nw, -1)
    w_flat = weight.reshape(embed_dim, -1)

    # Pure-f32 reference of Conv2d(stride=kernel) + flatten(2) + transpose(1,2).
    ref_f32 = (ref_p @ w_flat.T + bias).reshape(B, nh * nw, embed_dim)
    # Reference matching the kernel's bf16-input / f32-accumulate precision.
    ref_bf16 = (ref_p.astype(jnp.bfloat16).astype(jnp.float32)
                @ w_flat.T.astype(jnp.bfloat16).astype(jnp.float32)
                + bias).reshape(B, nh * nw, embed_dim)

    assert y.shape == (B, nh * nw, embed_dim)
    assert y.dtype == jnp.float32
    # Tight check against the precision-matched reference (validates layout/wiring).
    assert jnp.allclose(y, ref_bf16, atol=1e-3, rtol=1e-3), \
        float(jnp.max(jnp.abs(y - ref_bf16)))
    # Loose check against the full-f32 module semantics (bf16-input tolerance).
    assert jnp.allclose(y, ref_f32, atol=5e-2, rtol=5e-2), \
        float(jnp.max(jnp.abs(y - ref_f32)))

    print("KERNEL_OK")
</pallas_src>

<mosaic_0001>
module attributes {stable_mosaic.version = 11 : i64} {
  func.func @_patch_embed_kernel(%arg0: i32, %arg1: i32, %arg2: memref<1x16x64xbf16, #tpu.memory_space<vmem>>, %arg3: memref<64x32xbf16, #tpu.memory_space<vmem>>, %arg4: memref<1x32xf32, #tpu.memory_space<vmem>>, %arg5: memref<1x16x32xf32, #tpu.memory_space<vmem>>) attributes {dimension_semantics = [#tpu.dimension_semantics<parallel>, #tpu.dimension_semantics<parallel>], iteration_bounds = array<i64: 2, 1>, scalar_prefetch = 0 : i64, scratch_operands = 0 : i64, tpu.core_type = #tpu.core_type<tc>, window_params = [{transform_indices = @transform_0, window_bounds = array<i64: 1, 16, 64>}, {pipeline_mode = #tpu.pipeline_mode<synchronous>, transform_indices = @transform_1, window_bounds = array<i64: 64, 32>}, {pipeline_mode = #tpu.pipeline_mode<synchronous>, transform_indices = @transform_2, window_bounds = array<i64: 1, 32>}, {transform_indices = @transform_3, window_bounds = array<i64: 1, 16, 32>}]} {
    %c0 = arith.constant 0 : index
    %c0_0 = arith.constant 0 : index
    %c0_1 = arith.constant 0 : index
    %0 = vector.load %arg2[%c0, %c0_0, %c0_1] : memref<1x16x64xbf16, #tpu.memory_space<vmem>>, vector<1x16x64xbf16>
    %1 = vector.shape_cast %0 : vector<1x16x64xbf16> to vector<16x64xbf16>
    %c0_2 = arith.constant 0 : index
    %c0_3 = arith.constant 0 : index
    %2 = vector.load %arg3[%c0_2, %c0_3] : memref<64x32xbf16, #tpu.memory_space<vmem>>, vector<64x32xbf16>
    %cst = arith.constant dense<0.000000e+00> : vector<16x32xf32>
    %3 = tpu.matmul %1, %2, %cst {dimension_numbers = #tpu.dot_dimension_numbers<[1], [0], [0], [1], [0, 0, 1, 1], [], []>} : vector<16x64xbf16>, vector<64x32xbf16>, vector<16x32xf32> -> vector<16x32xf32>
    %c0_4 = arith.constant 0 : index
    %c0_5 = arith.constant 0 : index
    %4 = vector.load %arg4[%c0_4, %c0_5] : memref<1x32xf32, #tpu.memory_space<vmem>>, vector<1x32xf32>
    %5 = vector.broadcast %4 : vector<1x32xf32> to vector<16x32xf32>
    %6 = arith.addf %3, %5 : vector<16x32xf32>
    %c0_6 = arith.constant 0 : index
    %c0_7 = arith.constant 0 : index
    %c0_8 = arith.constant 0 : index
    %7 = vector.load %arg5[%c0_6, %c0_7, %c0_8] : memref<1x16x32xf32, #tpu.memory_space<vmem>>, vector<1x16x32xf32>
    %8 = vector.shape_cast %7 : vector<1x16x32xf32> to vector<16x32xf32>
    %9 = vector.shape_cast %6 : vector<16x32xf32> to vector<1x16x32xf32>
    tpu.vector_store %arg5[%c0_6, %c0_7, %c0_8], %9 {strides = array<i32>} : memref<1x16x32xf32, #tpu.memory_space<vmem>>, vector<1x16x32xf32>,
    return
  }
  func.func @transform_0(%arg0: i32, %arg1: i32) -> (i32, i32, i32) {
    %c0_i32 = arith.constant 0 : i32
    %c0_i32_0 = arith.constant 0 : i32
    return %arg0, %arg1, %c0_i32 : i32, i32, i32
  }
  func.func @transform_1(%arg0: i32, %arg1: i32) -> (i32, i32) {
    %c0_i32 = arith.constant 0 : i32
    %c0_i32_0 = arith.constant 0 : i32
    %c0_i32_1 = arith.constant 0 : i32
    return %c0_i32, %c0_i32_0 : i32, i32
  }
  func.func @transform_2(%arg0: i32, %arg1: i32) -> (i32, i32) {
    %c0_i32 = arith.constant 0 : i32
    %c0_i32_0 = arith.constant 0 : i32
    %c0_i32_1 = arith.constant 0 : i32
    return %c0_i32, %c0_i32_0 : i32, i32
  }
  func.func @transform_3(%arg0: i32, %arg1: i32) -> (i32, i32, i32) {
    %c0_i32 = arith.constant 0 : i32
    %c0_i32_0 = arith.constant 0 : i32
    return %arg0, %arg1, %c0_i32 : i32, i32, i32
  }
}

</mosaic_0001>

<llo_original>
// kernel: tpu_custom_call.1
$region0: #{tpu_custom_call.1}
  #allocation0 [shape = 'u32[]', space=smem, size = 0x4, offset = 0x4, fixed_abs, tag = 'smem constant byte address 0x4 - core index']
  #allocation1 [shape = 'u32[72,128]{1,0:T(1,128)}', space=vmem, size = 0x9000, scoped, tag = 'internal scratch']
  %s0 = inlined_call_operand.vmem [shape: bf16[2,16,64], index: 0, kind: input, shape index: {}]
  %s1 = inlined_call_operand.vmem [shape: bf16[64,32], index: 1, kind: input, shape index: {}]
  %s2 = inlined_call_operand.vmem [shape: f32[1,32], index: 2, kind: input, shape index: {}]
  %s3 = inlined_call_operand.hbm [shape: f32[2,16,32], index: 3, kind: output, shape index: {}]
  %s4 = sld [smem:[#allocation0]]
  $region45: #{tpu_custom_call.1} parent=0
    _
  %s6 = ssub.s32 1, %s4
  %s7 = scalar_select 0, %s6, %s4
  $region1: #{tpu_custom_call.1} parent=0
    #allocation2 [shape = 'u8[16384]{0}', space=vmem, size = 0x4000, scoped, tag = 'output window, operand 0']
    #allocation3 [shape = 's32[2]{0}', space=sflag, size = 0x8, scoped, tag = 'scoped memory for tpu_custom_call.1']
    %8 = vsyncpa [#allocation3], 0
    %s9 = scalar_lea.sflag [#allocation3], 1
    %10 = vsyncpa %s9, 0
    loop: start=0, step=1, limit=4
    $region2: #{tpu_custom_call.1} parent=1 // loop_pre_header
      _
    $region3: #{tpu_custom_call.1} parent=1 // loop_header
      %s12 = sphi 0, %s16
      %p13 = scmp.ge.s32.totalorder %s12, 4
      %s19 = sphi 0, %s31
      %s20 = sphi 0, %s27
      %s21 = sphi 0, %s19
      %s22 = sphi 0, %s20
      %s23 = sphi 0, %s21
      %s24 = sphi 0, %s22
      %s36 = sphi 0, %s38
      %s39 = sphi 0, %s36
      %s40 = sphi 0, %s39
      %s56 = sphi 0, %s40
      %s60 = sphi 0, %s60
      %s62 = sphi 0, %s60
      %s63 = sphi 0, %s62
      %s77 = sphi 0, %s63
      %s81 = sphi 0, %s81
      %s83 = sphi 0, %s81
      %s84 = sphi 0, %s83
      %s98 = sphi 0, %s84
      %s106 = sphi 0, %s108
      %s109 = sphi 0, %s106
      %s110 = sphi 0, %s109
      %s126 = sphi 0, %s110
    $region4: #{tpu_custom_call.1} parent=1 // loop_header_branch
      %15 = sbr.rel (%p13) target = $region8
    $region5: #{tpu_custom_call.1} parent=1 // loop_body
      %s17 = ssub.s32 %s12, 1
      %s18 = ssub.s32 %s12, 2
      %s25 = sadd.s32 1, %s20
      %p26 = scmp.ge.s32.totalorder %s25, 1
      %s27 = scalar_select %p26, 0, %s25
      %s28 = sadd.s32 1, %s19
      %s29 = scalar_select %p26, %s28, %s19
      %p30 = scmp.ge.s32.totalorder %s29, 2
      %s31 = scalar_select %p30, 0, %s29
      %s32 = ssub.s32 %s19, %s31
      %s33 = ssub.s32 %s20, %s27
      %s34 = sor.u32 %s32, %s33
      %p35 = scmp.eq.s32.totalorder %s34, 0
      %s37 = sadd.s32 %s36, 1
      %s38 = scalar_select %p35, %s36, %s37
      %p41 = pneg %p35
      %p42 = scmp.eq.s32.totalorder %s12, 1
      %p43 = por %p41, %p42
      %p44 = scmp.ne.s32.totalorder %s36, %s39
      %p45 = scmp.eq.s32.totalorder %s12, 0
      %p46 = por %p44, %p45
      %p47 = scmp.ne.s32.totalorder %s36, %s39
      %p48 = scmp.eq.s32.totalorder %s17, 1
      %p49 = por %p47, %p48
      %p50 = scmp.ne.s32.totalorder %s39, %s40
      %p51 = scmp.eq.s32.totalorder %s17, 0
      %p52 = por %p50, %p51
      %p53 = scmp.ne.s32.totalorder %s39, %s40
      %p54 = scmp.eq.s32.totalorder %s18, 1
      %p55 = por %p53, %p54
      %p57 = scmp.ne.s32.totalorder %s40, %s56
      %p58 = scmp.eq.s32.totalorder %s18, 0
      %p59 = por %p57, %p58
      %s61 = sadd.s32 %s60, 1
      %p64 = scmp.eq.s32.totalorder %s12, 1
      %p65 = scmp.ne.s32.totalorder %s60, %s62
      %p66 = scmp.eq.s32.totalorder %s12, 0
      %p67 = por %p65, %p66
      %p68 = scmp.ne.s32.totalorder %s60, %s62
      %p69 = scmp.eq.s32.totalorder %s17, 1
      %p70 = por %p68, %p69
      %p71 = scmp.ne.s32.totalorder %s62, %s63
      %p72 = scmp.eq.s32.totalorder %s17, 0
      %p73 = por %p71, %p72
      %p74 = scmp.ne.s32.totalorder %s62, %s63
      %p75 = scmp.eq.s32.totalorder %s18, 1
      %p76 = por %p74, %p75
      %p78 = scmp.ne.s32.totalorder %s63, %s77
      %p79 = scmp.eq.s32.totalorder %s18, 0
      %p80 = por %p78, %p79
      %s82 = sadd.s32 %s81, 1
      %p85 = scmp.eq.s32.totalorder %s12, 1
      %p86 = scmp.ne.s32.totalorder %s81, %s83
      %p87 = scmp.eq.s32.totalorder %s12, 0
      %p88 = por %p86, %p87
      %p89 = scmp.ne.s32.totalorder %s81, %s83
      %p90 = scmp.eq.s32.totalorder %s17, 1
      %p91 = por %p89, %p90
      %p92 = scmp.ne.s32.totalorder %s83, %s84
      %p93 = scmp.eq.s32.totalorder %s17, 0
      %p94 = por %p92, %p93
      %p95 = scmp.ne.s32.totalorder %s83, %s84
      %p96 = scmp.eq.s32.totalorder %s18, 1
      %p97 = por %p95, %p96
      %p99 = scmp.ne.s32.totalorder %s84, %s98
      %p100 = scmp.eq.s32.totalorder %s18, 0
      %p101 = por %p99, %p100
      %s102 = ssub.s32 %s19, %s31
      %s103 = ssub.s32 %s20, %s27
      %s104 = sor.u32 %s102, %s103
      %p105 = scmp.eq.s32.totalorder %s104, 0
      %s107 = sadd.s32 %s106, 1
      %s108 = scalar_select %p105, %s106, %s107
      %p111 = pneg %p105
      %p112 = scmp.eq.s32.totalorder %s12, 1
      %p113 = por %p111, %p112
      %p114 = scmp.ne.s32.totalorder %s106, %s109
      %p115 = scmp.eq.s32.totalorder %s12, 0
      %p116 = por %p114, %p115
      %p117 = scmp.ne.s32.totalorder %s106, %s109
      %p118 = scmp.eq.s32.totalorder %s17, 1
      %p119 = por %p117, %p118
      %p120 = scmp.ne.s32.totalorder %s109, %s110
      %p121 = scmp.eq.s32.totalorder %s17, 0
      %p122 = por %p120, %p121
      %p123 = scmp.ne.s32.totalorder %s109, %s110
      %p124 = scmp.eq.s32.totalorder %s18, 1
      %p125 = por %p123, %p124
      %p127 = scmp.ne.s32.totalorder %s110, %s126
      %p128 = scmp.eq.s32.totalorder %s18, 0
      %p129 = por %p127, %p128
      %p130 = scmp.le.s32.totalorder 1, %s12
      %p131 = scmp.lt.s32.totalorder %s12, 3
      %p132 = pnand %p130, %p131
      %p133 = pneg %p132
      // Predicated region
      $region9: #{tpu_custom_call.1} parent=5 // pred_check
        _
      $region10: #{tpu_custom_call.1} parent=5 // pred_check_branch
        %135 = sbr.rel (%p132) target = $region12
      $region11: #{tpu_custom_call.1} parent=5 // pred_region
        %s136 = ssub.s32 %s12, 1
        // Predicated region
        $region13: #{tpu_custom_call.1} parent=11 // pred_check
          %p137 = pneg %p73
        $region14: #{tpu_custom_call.1} parent=11 // pred_check_branch
          %139 = sbr.rel (%p137) target = $region16
        $region15: #{tpu_custom_call.1} parent=11 // pred_region
          _
        $region16: #{tpu_custom_call.1} parent=11 // pred_fallthru
          _
        // Predicated region
        $region17: #{tpu_custom_call.1} parent=11 // pred_check
          %p140 = pneg %p94
        $region18: #{tpu_custom_call.1} parent=11 // pred_check_branch
          %142 = sbr.rel (%p140) target = $region20
        $region19: #{tpu_custom_call.1} parent=11 // pred_region
          _
        $region20: #{tpu_custom_call.1} parent=11 // pred_fallthru
          _
      $region12: #{tpu_custom_call.1} parent=5 // pred_fallthru
        _
      %p143 = scmp.lt.s32.totalorder %s12, 2
      // Predicated region
      $region21: #{tpu_custom_call.1} parent=5 // pred_check
        %p144 = pneg %p143
      $region22: #{tpu_custom_call.1} parent=5 // pred_check_branch
        %146 = sbr.rel (%p144) target = $region24
      $region23: #{tpu_custom_call.1} parent=5 // pred_region
        // Predicated region
        $region25: #{tpu_custom_call.1} parent=23 // pred_check
          %p147 = pneg %p46
        $region26: #{tpu_custom_call.1} parent=23 // pred_check_branch
          %149 = sbr.rel (%p147) target = $region28
        $region27: #{tpu_custom_call.1} parent=23 // pred_region
          %s150 = smul.u32 2, %s20
          %p151 = scmp.lt.s32.totalorder %s19, 1
          %s152 = scalar_select %p151, %s19, 1
          %p153 = scmp.lt.s32.totalorder %s150, 1
          %s154 = scalar_select %p153, %s150, 1
          %s155 = smul.addr %s152, 2
          %s156 = sadd.s32 %s154, %s155
          %s157 = smul.addr %s156, 4
          %s158 = scalar_lea.vmem %s0, %s157
          %s159 = smul.u32 2, %s20
        $region28: #{tpu_custom_call.1} parent=23 // pred_fallthru
          _
      $region24: #{tpu_custom_call.1} parent=5 // pred_fallthru
        _
      %p160 = scmp.le.s32.totalorder 1, %s12
      %p161 = scmp.lt.s32.totalorder %s12, 3
      %p162 = pnand %p160, %p161
      %p163 = pneg %p162
      // Predicated region
      $region29: #{tpu_custom_call.1} parent=5 // pred_check
        _
      $region30: #{tpu_custom_call.1} parent=5 // pred_check_branch
        %165 = sbr.rel (%p162) target = $region32
      $region31: #{tpu_custom_call.1} parent=5 // pred_region
        %s166 = ssub.s32 %s12, 1
        %s167 = smul.u32 2, %s22
        %p168 = scmp.lt.s32.totalorder %s21, 1
        %s169 = scalar_select %p168, %s21, 1
        %p170 = scmp.lt.s32.totalorder %s167, 1
        %s171 = scalar_select %p170, %s167, 1
        %s172 = smul.addr %s169, 2
        %s173 = sadd.s32 %s171, %s172
        %s174 = smul.addr %s173, 4
        %s175 = scalar_lea.vmem %s0, %s174
        %p176 = pneg %p52
        %p177 = pneg %p49
        %p178 = pneg %p73
        %p179 = pneg %p70
        %p180 = pneg %p94
        %p181 = pneg %p91
        %p182 = pneg %p122
        %p183 = pneg %p119
        %s184 = sand.u32 %s109, 1
        %s185 = scalar_lea.sflag [#allocation3], %s184
        %s186 = sand.u32 %s109, 1
        %s187 = smul.addr %s186, 16
        %s188 = scalar_lea.vmem [#allocation2], %s187
        %s189 = smul.u32 2, %s22
        %p190 = scmp.lt.s32.totalorder %s21, 1
        %s191 = scalar_select %p190, %s21, 1
        %p192 = scmp.lt.s32.totalorder %s189, 1
        %s193 = scalar_select %p192, %s189, 1
        %s194 = smul.addr %s191, 2
        %s195 = sadd.s32 %s193, %s194
        %s196 = smul.addr %s195, 4
        %s197 = scalar_lea.vmem %s0, %s196
        %s198 = smul.u32 2, %s22
        %s199 = smul.u32 2, %s22
        %v201 = vld [vmem:[%s197] sm:$0xf]
        %v202 = vld [vmem:[%s197 + $0x4] sm:$0xf]
        %v203 = vld [vmem:[%s1] sm:$0xf]
        %v204 = vld [vmem:[%s1 + $0x4] sm:$0xf]
        %v205 = vld [vmem:[%s1 + $0x8] sm:$0xf]
        %v206 = vld [vmem:[%s1 + $0xc] sm:$0xf]
        %v207 = vld [vmem:[%s1 + $0x10] sm:$0xf]
        %v208 = vld [vmem:[%s1 + $0x14] sm:$0xf]
        %v209 = vld [vmem:[%s1 + $0x18] sm:$0xf]
        %v210 = vld [vmem:[%s1 + $0x1c] sm:$0xf]
        %v211 = vld [vmem:[%s2] sm:$0x1]
        %v213 = vperm.slane %v211, 0
        %v217 = vunpack.c.l.b16 %v201
        %v218 = vunpack.c.l.b16 %v202
        %v219 = vpack.c.b16 %v218, %v217
        %v228 = vunpack.c.l.b16 %v203
        %v229 = vunpack.c.l.b16 %v204
        %v230 = vunpack.c.l.b16 %v205
        %v231 = vunpack.c.l.b16 %v206
        %v232 = vunpack.c.l.b16 %v207
        %v233 = vunpack.c.l.b16 %v208
        %v234 = vunpack.c.l.b16 %v209
        %v235 = vunpack.c.l.b16 %v210
        %v236 = vpack.c.b16 %v229, %v228
        %v237 = vpack.c.b16 %v231, %v230
        %v238 = vpack.c.b16 %v233, %v232
        %v239 = vpack.c.b16 %v235, %v234
        %vm244 = vcmask 523264
        %v246 = vsel %vm244, %v219, 0
        %248 = vmatpush.bf16.msra.mxu0 0
        %249 = vmatpush.bf16.msra.mxu0 0
        %250 = vmatpush.bf16.msra.mxu0 0
        %251 = vmatpush.bf16.msra.mxu0 0
        %252 = vmatpush.bf16.msra.mxu0 %v239
        %253 = vmatpush.bf16.msra.mxu0 %v238
        %254 = vmatpush.bf16.msra.mxu0 %v237
        %255 = vmatpush.bf16.msra.mxu0 %v236
        %256 = vmatmul.bf16.gmra.mxu0 %v246
        %v257 = vpop.f32.mrf.mxu0
        %v258 = vadd.f32 %v213, %v257
        %v259 = vpop.f32.mrf.mxu0
        %v260 = vadd.f32 %v213, %v259
        %261 = vdwg.mxu0
        %vm262 = vcmask 261120
        %263 = vst.msk [vmem:[%s188] sm:$0xff] %vm262, %v258
        %264 = vst.msk [vmem:[%s188 + $0x8] sm:$0xff] %vm262, %v260
        %s265 = sand.u32 %s109, 1
        %s266 = scalar_lea.sflag [#allocation3], %s265
        %s267 = sand.u32 %s109, 1
        %s268 = smul.addr %s267, 16
        %s269 = scalar_lea.vmem [#allocation2], %s268
        // Predicated region
        $region33: #{tpu_custom_call.1} parent=31 // pred_check
          %p270 = pneg %p119
        $region34: #{tpu_custom_call.1} parent=31 // pred_check_branch
          %272 = sbr.rel (%p270) target = $region36
        $region35: #{tpu_custom_call.1} parent=31 // pred_region
          %s273 = smul.u32 2, %s22
          %275 = vsyncadd %s266, 0
          %s276 = smul.addr %s21, 2
          %s277 = sadd.s32 %s273, %s276
          %s278 = smul.addr %s277, 8
          %s279 = scalar_lea.hbm %s3, %s278
          %s280 = sshll.u32 %s269, 4
          %s281 = int_to_ptr.vmem [resolvable:$true] %s280
          %s282 = sshll.u32 %s279, 4
          %s283 = int_to_ptr.hbm [resolvable:$true] %s282
          %288 = dma.vmem_to_hbm [thread:$0]  %s281, 256, %s283, %s266, 128, 128, 8
        $region36: #{tpu_custom_call.1} parent=31 // pred_fallthru
          _
      $region32: #{tpu_custom_call.1} parent=5 // pred_fallthru
        _
      %p289 = scmp.le.s32.totalorder 2, %s12
      // Predicated region
      $region37: #{tpu_custom_call.1} parent=5 // pred_check
        %p290 = pneg %p289
      $region38: #{tpu_custom_call.1} parent=5 // pred_check_branch
        %292 = sbr.rel (%p290) target = $region40
      $region39: #{tpu_custom_call.1} parent=5 // pred_region
        %s293 = ssub.s32 %s12, 2
        // Predicated region
        $region41: #{tpu_custom_call.1} parent=39 // pred_check
          %p294 = pneg %p125
        $region42: #{tpu_custom_call.1} parent=39 // pred_check_branch
          %296 = sbr.rel (%p294) target = $region44
        $region43: #{tpu_custom_call.1} parent=39 // pred_region
          %s297 = sand.u32 %s110, 1
          %s298 = scalar_lea.sflag [#allocation3], %s297
          %s299 = sand.u32 %s110, 1
          %s300 = smul.addr %s299, 16
          %s301 = scalar_lea.vmem [#allocation2], %s300
          %303 = dma.done %s298, 256
        $region44: #{tpu_custom_call.1} parent=39 // pred_fallthru
          _
      $region40: #{tpu_custom_call.1} parent=5 // pred_fallthru
        _
    $region6: #{tpu_custom_call.1} parent=1 // loop_footer
      %s16 = sadd.s32 1, %s12
    $region7: #{tpu_custom_call.1} parent=1 // loop_footer_branch
      %11 = sbr.rel target = $region3
    $region8: #{tpu_custom_call.1} parent=1 // loop_exit
      _
    %304 = vsyncpa [#allocation3], 1
    %s305 = scalar_lea.sflag [#allocation3], 1
    %306 = vsyncpa %s305, 1

</llo_original>
